<compile_context>
chip_gen: v5e
topology: v5e:2x2
jax: 0.10.0
libtpu: 0.0.40
codegen_flags: <defaults>
</compile_context>

<pallas_src>
import jax
import jax.numpy as jnp
from jax.experimental import pallas as pl
from jax.experimental.pallas import tpu as pltpu


def _prelu_kernel(alpha_ref, x_ref, o_ref):
    # alpha_ref: SMEM scalar (shape (1,), f32); x_ref/o_ref: VMEM (tr, 128)
    # tiles in the input's native dtype.
    x = x_ref[...].astype(jnp.float32)          # in-register upcast (no-op for f32)
    a = alpha_ref[0]
    o_ref[...] = jnp.where(x >= 0.0, x, a * x).astype(o_ref.dtype)


def prelu(x, alphas, *, tile_rows=2048):
    """PReLU forward. x: any shape (e.g. NCHW), alphas: shape (1,) float32."""
    assert alphas.shape == (1,), "kernel implements the num_parameters=1 case"
    orig_shape = x.shape
    lane = 128

    flat = x.reshape(-1)                        # metadata-only for contiguous x
    n = flat.shape[0]
    rem = n % lane
    if rem != 0:
        # TODO(synk): ragged tail (< 128 elems) falls back to a pad/slice copy;
        # conv-style activation sizes hit the zero-copy fast path above.
        flat = jnp.pad(flat, (0, lane - rem))

    rows = flat.shape[0] // lane
    x2d = flat.reshape(rows, lane)              # metadata-only reshape

    # Block rows: big tiles for bandwidth, clamped so the block never exceeds
    # the array (block == full dim is always legal; 2048 is 8-divisible).
    tr = tile_rows if rows >= tile_rows else rows
    grid = (pl.cdiv(rows, tr),)

    out2d = pl.pallas_call(
        _prelu_kernel,
        out_shape=jax.ShapeDtypeStruct((rows, lane), x.dtype),
        grid_spec=pltpu.PrefetchScalarGridSpec(
            num_scalar_prefetch=0,
            grid=grid,
            in_specs=[
                pl.BlockSpec(memory_space=pltpu.MemorySpace.SMEM),  # alphas
                pl.BlockSpec((tr, lane), lambda i: (i, 0)),         # x tile
            ],
            out_specs=pl.BlockSpec((tr, lane), lambda i: (i, 0)),
        ),
        compiler_params=pltpu.CompilerParams(
            dimension_semantics=("parallel",),
            vmem_limit_bytes=32 * 1024 * 1024,
        ),
    )(alphas.astype(jnp.float32), x2d)

    out = out2d.reshape(-1)
    if rem != 0:
        out = out[:n]
    return out.reshape(orig_shape)


if __name__ == "__main__":
    key = jax.random.PRNGKey(0)
    # NCHW input consistent with a conv layer feeding this activation.
    x = jax.random.normal(key, (2, 4, 16, 16), dtype=jnp.float32)

    # Deterministic parameter init, matching nn.Parameter(0.1 * ones(1)).
    alphas = jnp.full((1,), 0.1, dtype=jnp.float32)

    out = prelu(x, alphas)
    out = jax.block_until_ready(out)

    # Reference check (plain JAX) — same formula as the PyTorch module.
    ref = jnp.maximum(x, 0.0) + alphas[0] * (x - jnp.abs(x)) * 0.5
    assert out.shape == x.shape and out.dtype == x.dtype
    assert jnp.allclose(out, ref, atol=1e-6, rtol=1e-6)

    print("KERNEL_OK")
</pallas_src>

<mosaic_0001>
module attributes {stable_mosaic.version = 11 : i64} {
  func.func @_prelu_kernel(%arg0: i32, %arg1: memref<1xf32, #tpu.memory_space<smem>>, %arg2: memref<16x128xf32, #tpu.memory_space<vmem>>, %arg3: memref<16x128xf32, #tpu.memory_space<vmem>>) attributes {dimension_semantics = [#tpu.dimension_semantics<parallel>], iteration_bounds = array<i64: 1>, scalar_prefetch = 0 : i64, scratch_operands = 0 : i64, tpu.core_type = #tpu.core_type<tc>, window_params = [{transform_indices = @transform_0, window_bounds = array<i64: 1>}, {transform_indices = @transform_1, window_bounds = array<i64: 16, 128>}, {transform_indices = @transform_2, window_bounds = array<i64: 16, 128>}]} {
    %c0 = arith.constant 0 : index
    %c0_0 = arith.constant 0 : index
    %0 = vector.load %arg2[%c0, %c0_0] : memref<16x128xf32, #tpu.memory_space<vmem>>, vector<16x128xf32>
    %c0_1 = arith.constant 0 : index
    %1 = memref.load %arg1[%c0_1] : memref<1xf32, #tpu.memory_space<smem>>
    %cst = arith.constant 0.000000e+00 : f32
    %2 = vector.broadcast %cst : f32 to vector<16x128xf32>
    %3 = arith.cmpf oge, %0, %2 : vector<16x128xf32>
    %4 = vector.broadcast %1 : f32 to vector<16x128xf32>
    %5 = arith.mulf %4, %0 : vector<16x128xf32>
    %6 = arith.select %3, %0, %5 : vector<16x128xi1>, vector<16x128xf32>
    %c0_2 = arith.constant 0 : index
    %c0_3 = arith.constant 0 : index
    %7 = vector.load %arg3[%c0_2, %c0_3] : memref<16x128xf32, #tpu.memory_space<vmem>>, vector<16x128xf32>
    tpu.vector_store %arg3[%c0_2, %c0_3], %6 {strides = array<i32>} : memref<16x128xf32, #tpu.memory_space<vmem>>, vector<16x128xf32>,
    return
  }
  func.func @transform_0(%arg0: i32) -> i32 {
    %c0_i32 = arith.constant 0 : i32
    %c0_i32_0 = arith.constant 0 : i32
    return %c0_i32 : i32
  }
  func.func @transform_1(%arg0: i32) -> (i32, i32) {
    %c0_i32 = arith.constant 0 : i32
    %c0_i32_0 = arith.constant 0 : i32
    return %arg0, %c0_i32 : i32, i32
  }
  func.func @transform_2(%arg0: i32) -> (i32, i32) {
    %c0_i32 = arith.constant 0 : i32
    %c0_i32_0 = arith.constant 0 : i32
    return %arg0, %c0_i32 : i32, i32
  }
}

</mosaic_0001>

<llo_original>
// kernel: tpu_custom_call.1
$region0: #{tpu_custom_call.1}
  #allocation0 [shape = 'u32[]', space=smem, size = 0x4, offset = 0x4, fixed_abs, tag = 'smem constant byte address 0x4 - core index']
  #allocation1 [shape = 'u32[72,128]{1,0:T(1,128)}', space=vmem, size = 0x9000, scoped, tag = 'internal scratch']
  #allocation2 [shape = 'f32[1]{0:T(128)S(6)}', space=smem, size = 0x200, scoped, tag = 'scoped memory for tpu_custom_call.1']
  %s0 = inlined_call_operand.<no memory space> [shape: f32[1], index: 0, kind: input, shape index: {}]
  %s1 = inlined_call_operand.hbm [shape: f32[16,128], index: 1, kind: input, shape index: {}]
  %s2 = inlined_call_operand.hbm [shape: f32[16,128], index: 2, kind: output, shape index: {}]
  %s3 = sld [smem:[#allocation0]]
  $region22: #{tpu_custom_call.1} parent=0
    _
  %s5 = ssub.s32 1, %s3
  %s6 = scalar_select 0, %s5, %s3
  %7 = sst [smem:[#allocation2]] %s0
  $region1: #{tpu_custom_call.1} parent=0
    #allocation3 [shape = 'u8[8192]{0}', space=vmem, size = 0x2000, scoped, tag = 'input window, operand 1, single buffered']
    #allocation4 [shape = 's32[1]{0}', space=sflag, size = 0x4, scoped, tag = 'scoped memory for tpu_custom_call.1']
    #allocation5 [shape = 's32[1]{0}', space=sflag, size = 0x4, scoped, tag = 'scoped memory for tpu_custom_call.1']
    #allocation6 [shape = 'u8[8192]{0}', space=vmem, size = 0x2000, scoped, tag = 'output window, operand 0, single buffered']
    %8 = vsyncpa [#allocation4], 0
    %9 = vsyncpa [#allocation5], 0
    // Predicated region
    $region2: #{tpu_custom_call.1} parent=1 // pred_check
      _
    $region3: #{tpu_custom_call.1} parent=1 // pred_check_branch
      %11 = sbr.rel (0) target = $region5
    $region4: #{tpu_custom_call.1} parent=1 // pred_region
      _
    $region5: #{tpu_custom_call.1} parent=1 // pred_fallthru
      _
    // Predicated region
    $region6: #{tpu_custom_call.1} parent=1 // pred_check
      _
    $region7: #{tpu_custom_call.1} parent=1 // pred_check_branch
      %13 = sbr.rel (0) target = $region9
    $region8: #{tpu_custom_call.1} parent=1 // pred_region
      %15 = vsyncadd [#allocation4], 0
      %s16 = sshll.u32 %s1, 4
      %s17 = int_to_ptr.hbm [resolvable:$true] %s16
      %s18 = sshll.u32 [#allocation3], 4
      %s19 = int_to_ptr.vmem [resolvable:$true] %s18
      %24 = dma.hbm_to_vmem [thread:$0]  %s17, 256, %s19, [#allocation4], 128, 128, 8
    $region9: #{tpu_custom_call.1} parent=1 // pred_fallthru
      _
    // Predicated region
    $region10: #{tpu_custom_call.1} parent=1 // pred_check
      _
    $region11: #{tpu_custom_call.1} parent=1 // pred_check_branch
      %26 = sbr.rel (0) target = $region13
    $region12: #{tpu_custom_call.1} parent=1 // pred_region
      %28 = dma.done [#allocation4], 256
    $region13: #{tpu_custom_call.1} parent=1 // pred_fallthru
      _
    %v29 = vld [vmem:[#allocation3] sm:$0xff]
    %v30 = vld [vmem:[#allocation3 + $0x8] sm:$0xff]
    %s31 = sld [smem:[#allocation2]]
    %vm32 = vcmp.ge.f32.partialorder %v29, 0.0
    %vm33 = vcmp.ge.f32.partialorder %v30, 0.0
    %v34 = vstv %s31
    %v35 = vmul.f32 %v34, %v29
    %v36 = vmul.f32 %v34, %v30
    %v37 = vsel %vm32, %v29, %v35
    %v38 = vsel %vm33, %v30, %v36
    %39 = vst [vmem:[#allocation6] sm:$0xff] %v37
    %40 = vst [vmem:[#allocation6 + $0x8] sm:$0xff] %v38
    // Predicated region
    $region14: #{tpu_custom_call.1} parent=1 // pred_check
      _
    $region15: #{tpu_custom_call.1} parent=1 // pred_check_branch
      %42 = sbr.rel (0) target = $region17
    $region16: #{tpu_custom_call.1} parent=1 // pred_region
      %44 = vsyncadd [#allocation5], 0
      %s45 = sshll.u32 [#allocation6], 4
      %s46 = int_to_ptr.vmem [resolvable:$true] %s45
      %s47 = sshll.u32 %s2, 4
      %s48 = int_to_ptr.hbm [resolvable:$true] %s47
      %53 = dma.vmem_to_hbm [thread:$0]  %s46, 256, %s48, [#allocation5], 128, 128, 8
    $region17: #{tpu_custom_call.1} parent=1 // pred_fallthru
      _
    // Predicated region
    $region18: #{tpu_custom_call.1} parent=1 // pred_check
      _
    $region19: #{tpu_custom_call.1} parent=1 // pred_check_branch
      %55 = sbr.rel (0) target = $region21
    $region20: #{tpu_custom_call.1} parent=1 // pred_region
      %57 = dma.done [#allocation5], 256
    $region21: #{tpu_custom_call.1} parent=1 // pred_fallthru
      _
    %58 = vsyncpa [#allocation4], 1
    %59 = vsyncpa [#allocation5], 1

</llo_original>
